<compile_context>
chip_gen: v7x
topology: tpu7x:2x2x1
jax: 0.10.0
libtpu: 0.0.40
codegen_flags: <defaults>
</compile_context>

<pallas_src>
import functools

import jax
import jax.numpy as jnp
from jax.experimental import pallas as pl
from jax.experimental.pallas import tpu as pltpu

T = 30          # frames per clip
D = 136         # 68 keypoints * 2 interleaved coordinates
N_MOUTH = 37.0  # divisor used by the module for the mouth centering


def _lip_cossim_kernel(wc_ref, sseg_ref, sdiff_ref, ones_ref, tval_ref,
                       rest_ref, p_ref, t_ref, out_ref):
    """One grid step: TB clips flattened to (TB*T, D)."""
    i = pl.program_id(1)

    @pl.when(i == 0)
    def _init():
        out_ref[...] = jnp.zeros_like(out_ref)

    p = p_ref[...]              # (R, D) f32, R = TB*T
    t = t_ref[...]
    d = p - t                   # linearity: center(p)-center(t) == center(p-t)

    # Centered mouth difference: mouth diag-mask and the per-frame x/y mean
    # subtraction are folded into one constant matrix -> a single MXU matmul.
    e = jnp.dot(d, wc_ref[...], preferred_element_type=jnp.float32)    # (R, D)

    # L1(pred_mouth, target_mouth): total |e| (row reduction on the MXU, then a
    # tiny (1, D) lane sum).
    lo1 = jnp.sum(jnp.dot(ones_ref[...], jnp.abs(e),
                          preferred_element_type=jnp.float32))

    # L1 of the temporal diffs. diff(pm)-diff(tm) == diff(e); rows that cross a
    # clip boundary inside the flattened tile get zero weight in tval_ref.
    de = e[1:, :] - e[:-1, :]                                           # (R-1, D)
    lo2 = jnp.sum(jnp.dot(tval_ref[...], jnp.abs(de),
                          preferred_element_type=jnp.float32))

    # MSE(|p|.mean(time), |t|.mean(time)): per-clip time sums via a 0/1 segment
    # matrix on the MXU.  m = T * (mean|p| - mean|t|); the /T^2 is applied in
    # the wrapper.
    m = jnp.dot(sseg_ref[...], jnp.abs(p) - jnp.abs(t),
                preferred_element_type=jnp.float32)                     # (TB, D)
    re1 = jnp.sum(m * m)

    # Rest path: mean_t diff(x*rest, time) == rest * (x[T-1]-x[0]) / (T-1)
    # (telescoping).  sdiff_ref picks (last - first) row per clip; /(T-1)^2 is
    # applied in the wrapper.
    ap = jnp.dot(sdiff_ref[...], p, preferred_element_type=jnp.float32)  # (TB, D)
    at = jnp.dot(sdiff_ref[...], t, preferred_element_type=jnp.float32)
    dr = jnp.abs(ap) - jnp.abs(at)
    re2 = jnp.sum(rest_ref[...] * dr * dr)

    # Pack the four partial sums into lanes 0..3 of the per-core accumulator.
    lane = jax.lax.broadcasted_iota(jnp.int32, (1, 8, 128), 2)
    upd = (jnp.where(lane == 0, lo1, 0.0)
           + jnp.where(lane == 1, lo2, 0.0)
           + jnp.where(lane == 2, re1, 0.0)
           + jnp.where(lane == 3, re2, 0.0))
    out_ref[...] += upd


def _build_constants(tb):
    """Grid-invariant selector / weight matrices (built once in the wrapper)."""
    r = tb * T
    col = jnp.arange(D)
    mouth = jnp.logical_or(col < 34, col >= D - 40).astype(jnp.float32)    # (D,)
    # W_center = diag(mouth) @ (I - Par/37), Par[k, d] = [parity(k)==parity(d)]
    par = (col[:, None] % 2 == col[None, :] % 2).astype(jnp.float32)       # (D, D)
    w_center = jnp.diag(mouth) - (mouth[:, None] * par) / N_MOUTH          # (D, D)
    rest_row = (1.0 - mouth)[None, :]                                      # (1, D)

    rows = jnp.arange(r)
    seg = rows // T
    s_seg = (seg[None, :] == jnp.arange(tb)[:, None]).astype(jnp.float32)  # (TB, R)
    is_first = (rows % T == 0).astype(jnp.float32)
    is_last = (rows % T == T - 1).astype(jnp.float32)
    s_diff = s_seg * (is_last - is_first)[None, :]                         # (TB, R)

    ones_row = jnp.ones((1, r), jnp.float32)                               # (1, R)
    tvalid = ((jnp.arange(r - 1) % T) != (T - 1)).astype(jnp.float32)[None, :]
    return w_center, s_seg, s_diff, ones_row, tvalid, rest_row


@functools.partial(jax.jit, static_argnames=("max_tb",))
def lip_cossim_pallas(pred_kp, target_kp, max_tb=64):
    """pred_kp, target_kp: (B, 30, 136). Returns (loss_rest, loss_lower)."""
    B = pred_kp.shape[0]
    assert pred_kp.shape == (B, T, D) and target_kp.shape == (B, T, D)

    # Blocking: TB clips per grid step (multiple of 4 so TB*T % 8 == 0),
    # 2 "parallel" core slots when the batch is large enough (v7x megacore).
    nc = 2 if B >= 8 else 1
    tb = -(-B // nc)
    tb = min(max_tb, max(4, -(-tb // 4) * 4))
    n_inner = -(-B // (nc * tb))
    bp = nc * tb * n_inner
    r = tb * T

    p = pred_kp.astype(jnp.float32)
    t = target_kp.astype(jnp.float32)
    if bp != B:
        # Zero-padded clips contribute exactly 0 to every accumulated sum.
        pad = ((0, bp - B), (0, 0), (0, 0))
        p = jnp.pad(p, pad)
        t = jnp.pad(t, pad)
    p2 = p.reshape(bp * T, D)
    t2 = t.reshape(bp * T, D)

    w_center, s_seg, s_diff, ones_row, tvalid, rest_row = _build_constants(tb)

    def const_spec(shape):
        return pl.BlockSpec(shape, lambda c, i: (0, 0))

    data_spec = pl.BlockSpec((r, D), lambda c, i: (c * n_inner + i, 0))

    sums = pl.pallas_call(
        _lip_cossim_kernel,
        out_shape=jax.ShapeDtypeStruct((nc, 8, 128), jnp.float32),
        grid_spec=pltpu.PrefetchScalarGridSpec(
            num_scalar_prefetch=0,
            grid=(nc, n_inner),
            in_specs=[
                const_spec((D, D)),        # w_center
                const_spec((tb, r)),       # s_seg
                const_spec((tb, r)),       # s_diff
                const_spec((1, r)),        # ones_row
                const_spec((1, r - 1)),    # tvalid
                const_spec((1, D)),        # rest_row
                data_spec,                 # pred (flattened)
                data_spec,                 # target (flattened)
            ],
            out_specs=pl.BlockSpec((1, 8, 128), lambda c, i: (c, 0, 0)),
        ),
        compiler_params=pltpu.CompilerParams(
            dimension_semantics=("parallel", "arbitrary"),
            vmem_limit_bytes=48 * 1024 * 1024,
        ),
    )(w_center, s_seg, s_diff, ones_row, tvalid, rest_row, p2, t2)

    tot = jnp.sum(sums[:, 0, :4], axis=0)          # sum per-core partials
    lo1, lo2, re1, re2 = tot[0], tot[1], tot[2], tot[3]

    # Apply the 'mean' reductions of L1Loss / MSELoss and the folded-out
    # 1/T and 1/(T-1) factors of the two energy terms.
    loss_lower = lo1 / (B * T * D) + lo2 / (B * (T - 1) * D)
    loss_rest = re1 / (B * D * T * T) + re2 / (B * D * (T - 1) * (T - 1))
    return loss_rest, loss_lower


def lip_cossim_ref(pred_kp, target_kp):
    """Pure-JAX reference mirroring the PyTorch forward exactly."""
    wt_mouth = jnp.zeros(D).at[-40:].set(1.0).at[:34].set(1.0)
    wt_rest = 1.0 - wt_mouth

    def center(x):
        xm = x * wt_mouth
        x4 = xm.reshape(-1, T, 68, 2)
        x4 = x4 - x4.sum(axis=2, keepdims=True) / N_MOUTH
        return x4.reshape(-1, T, D)

    pm = center(pred_kp)
    tm = center(target_kp)
    loss_lower = jnp.mean(jnp.abs(pm - tm))
    loss_lower += jnp.mean(jnp.abs(jnp.diff(pm, axis=1) - jnp.diff(tm, axis=1)))

    loss_rest = jnp.mean(
        (jnp.abs(pred_kp).mean(axis=1) - jnp.abs(target_kp).mean(axis=1)) ** 2
    )
    pr = jnp.diff(pred_kp * wt_rest, axis=1)
    tr = jnp.diff(target_kp * wt_rest, axis=1)
    loss_rest += jnp.mean((jnp.abs(pr.mean(axis=1)) - jnp.abs(tr.mean(axis=1))) ** 2)
    return loss_rest, loss_lower


if __name__ == "__main__":
    key = jax.random.PRNGKey(0)

    # Main small-shape check (B=2, single block, single core slot).
    k1, k2 = jax.random.split(key)
    B = 2
    pred_kp = jax.random.normal(k1, (B, T, D), dtype=jnp.float32)
    target_kp = jax.random.normal(k2, (B, T, D), dtype=jnp.float32)

    loss_rest, loss_lower = lip_cossim_pallas(pred_kp, target_kp)
    loss_rest = jax.block_until_ready(loss_rest)
    loss_lower = jax.block_until_ready(loss_lower)

    ref_rest, ref_lower = lip_cossim_ref(pred_kp, target_kp)
    assert jnp.allclose(loss_rest, ref_rest, rtol=1e-3, atol=1e-5), (loss_rest, ref_rest)
    assert jnp.allclose(loss_lower, ref_lower, rtol=1e-3, atol=1e-5), (loss_lower, ref_lower)

    # Secondary check exercising batch padding, the parallel core axis and
    # multi-step accumulation (B=9 with a deliberately small block).
    k3, k4 = jax.random.split(k2)
    B2 = 9
    pred9 = jax.random.normal(k3, (B2, T, D), dtype=jnp.float32)
    targ9 = jax.random.normal(k4, (B2, T, D), dtype=jnp.float32)
    r2, l2 = lip_cossim_pallas(pred9, targ9, max_tb=4)
    r2 = jax.block_until_ready(r2)
    l2 = jax.block_until_ready(l2)
    rr2, rl2 = lip_cossim_ref(pred9, targ9)
    assert jnp.allclose(r2, rr2, rtol=1e-3, atol=1e-5), (r2, rr2)
    assert jnp.allclose(l2, rl2, rtol=1e-3, atol=1e-5), (l2, rl2)

    print("KERNEL_OK")
</pallas_src>

<mosaic_0001>
module attributes {stable_mosaic.version = 11 : i64} {
  func.func @_lip_cossim_kernel(%arg0: i32, %arg1: i32, %arg2: memref<136x136xf32, #tpu.memory_space<vmem>>, %arg3: memref<4x120xf32, #tpu.memory_space<vmem>>, %arg4: memref<4x120xf32, #tpu.memory_space<vmem>>, %arg5: memref<1x120xf32, #tpu.memory_space<vmem>>, %arg6: memref<1x119xf32, #tpu.memory_space<vmem>>, %arg7: memref<1x136xf32, #tpu.memory_space<vmem>>, %arg8: memref<120x136xf32, #tpu.memory_space<vmem>>, %arg9: memref<120x136xf32, #tpu.memory_space<vmem>>, %arg10: memref<1x8x128xf32, #tpu.memory_space<vmem>>) attributes {dimension_semantics = [#tpu.dimension_semantics<parallel>, #tpu.dimension_semantics<arbitrary>], iteration_bounds = array<i64: 1, 1>, scalar_prefetch = 0 : i64, scratch_operands = 0 : i64, tpu.core_type = #tpu.core_type<tc>, window_params = [{pipeline_mode = #tpu.pipeline_mode<synchronous>, transform_indices = @transform_0, window_bounds = array<i64: 136, 136>}, {pipeline_mode = #tpu.pipeline_mode<synchronous>, transform_indices = @transform_1, window_bounds = array<i64: 4, 120>}, {pipeline_mode = #tpu.pipeline_mode<synchronous>, transform_indices = @transform_2, window_bounds = array<i64: 4, 120>}, {pipeline_mode = #tpu.pipeline_mode<synchronous>, transform_indices = @transform_3, window_bounds = array<i64: 1, 120>}, {pipeline_mode = #tpu.pipeline_mode<synchronous>, transform_indices = @transform_4, window_bounds = array<i64: 1, 119>}, {pipeline_mode = #tpu.pipeline_mode<synchronous>, transform_indices = @transform_5, window_bounds = array<i64: 1, 136>}, {transform_indices = @transform_6, window_bounds = array<i64: 120, 136>}, {transform_indices = @transform_7, window_bounds = array<i64: 120, 136>}, {transform_indices = @transform_8, window_bounds = array<i64: 1, 8, 128>}]} {
    %c0_i32 = arith.constant 0 : i32
    %0 = arith.cmpi eq, %arg1, %c0_i32 : i32
    %1 = arith.extui %0 : i1 to i32
    %c0_i32_0 = arith.constant 0 : i32
    %2 = arith.cmpi ne, %1, %c0_i32_0 : i32
    scf.if %2 {
      %cst_38 = arith.constant 0.000000e+00 : f32
      %77 = vector.broadcast %cst_38 : f32 to vector<1x8x128xf32>
      %c0_39 = arith.constant 0 : index
      %c0_40 = arith.constant 0 : index
      %c0_41 = arith.constant 0 : index
      %78 = vector.load %arg10[%c0_39, %c0_40, %c0_41] : memref<1x8x128xf32, #tpu.memory_space<vmem>>, vector<1x8x128xf32>
      tpu.vector_store %arg10[%c0_39, %c0_40, %c0_41], %77 {strides = array<i32>} : memref<1x8x128xf32, #tpu.memory_space<vmem>>, vector<1x8x128xf32>,
    } else {
    }
    %c0 = arith.constant 0 : index
    %c0_1 = arith.constant 0 : index
    %3 = vector.load %arg8[%c0, %c0_1] : memref<120x136xf32, #tpu.memory_space<vmem>>, vector<120x136xf32>
    %c0_2 = arith.constant 0 : index
    %c0_3 = arith.constant 0 : index
    %4 = vector.load %arg9[%c0_2, %c0_3] : memref<120x136xf32, #tpu.memory_space<vmem>>, vector<120x136xf32>
    %5 = arith.subf %3, %4 : vector<120x136xf32>
    %c0_4 = arith.constant 0 : index
    %c0_5 = arith.constant 0 : index
    %6 = vector.load %arg2[%c0_4, %c0_5] : memref<136x136xf32, #tpu.memory_space<vmem>>, vector<136x136xf32>
    %cst = arith.constant dense<0.000000e+00> : vector<120x136xf32>
    %7 = tpu.matmul %5, %6, %cst {dimension_numbers = #tpu.dot_dimension_numbers<[1], [0], [0], [1], [0, 0, 1, 1], [], []>} : vector<120x136xf32>, vector<136x136xf32>, vector<120x136xf32> -> vector<120x136xf32>
    %c0_6 = arith.constant 0 : index
    %c0_7 = arith.constant 0 : index
    %8 = vector.load %arg5[%c0_6, %c0_7] : memref<1x120xf32, #tpu.memory_space<vmem>>, vector<1x120xf32>
    %9 = math.absf %7 : vector<120x136xf32>
    %cst_8 = arith.constant dense<0.000000e+00> : vector<1x136xf32>
    %10 = tpu.matmul %8, %9, %cst_8 {dimension_numbers = #tpu.dot_dimension_numbers<[1], [0], [0], [1], [0, 0, 1, 1], [], []>} : vector<1x120xf32>, vector<120x136xf32>, vector<1x136xf32> -> vector<1x136xf32>
    %11 = vector.shape_cast %10 : vector<1x136xf32> to vector<1x1x136xf32>
    %cst_9 = arith.constant dense<0.000000e+00> : vector<1xf32>
    %12 = vector.multi_reduction <add>, %11, %cst_9 [1, 2] : vector<1x1x136xf32> to vector<1xf32>
    %13 = vector.shape_cast %12 : vector<1xf32> to vector<1x1x1xf32>
    %14 = vector.extract %13[0, 0, 0] : f32 from vector<1x1x1xf32>
    %15 = vector.extract_strided_slice %7 {offsets = [1, 0], sizes = [119, 136], strides = [1, 1]} : vector<120x136xf32> to vector<119x136xf32>
    %16 = vector.extract_strided_slice %7 {offsets = [0, 0], sizes = [119, 136], strides = [1, 1]} : vector<120x136xf32> to vector<119x136xf32>
    %17 = arith.subf %15, %16 : vector<119x136xf32>
    %c0_10 = arith.constant 0 : index
    %c0_11 = arith.constant 0 : index
    %18 = vector.load %arg6[%c0_10, %c0_11] : memref<1x119xf32, #tpu.memory_space<vmem>>, vector<1x119xf32>
    %19 = math.absf %17 : vector<119x136xf32>
    %cst_12 = arith.constant dense<0.000000e+00> : vector<1x136xf32>
    %20 = tpu.matmul %18, %19, %cst_12 {dimension_numbers = #tpu.dot_dimension_numbers<[1], [0], [0], [1], [0, 0, 1, 1], [], []>} : vector<1x119xf32>, vector<119x136xf32>, vector<1x136xf32> -> vector<1x136xf32>
    %21 = vector.shape_cast %20 : vector<1x136xf32> to vector<1x1x136xf32>
    %cst_13 = arith.constant dense<0.000000e+00> : vector<1xf32>
    %22 = vector.multi_reduction <add>, %21, %cst_13 [1, 2] : vector<1x1x136xf32> to vector<1xf32>
    %23 = vector.shape_cast %22 : vector<1xf32> to vector<1x1x1xf32>
    %24 = vector.extract %23[0, 0, 0] : f32 from vector<1x1x1xf32>
    %c0_14 = arith.constant 0 : index
    %c0_15 = arith.constant 0 : index
    %25 = vector.load %arg3[%c0_14, %c0_15] : memref<4x120xf32, #tpu.memory_space<vmem>>, vector<4x120xf32>
    %26 = math.absf %3 : vector<120x136xf32>
    %27 = math.absf %4 : vector<120x136xf32>
    %28 = arith.subf %26, %27 : vector<120x136xf32>
    %cst_16 = arith.constant dense<0.000000e+00> : vector<4x136xf32>
    %29 = tpu.matmul %25, %28, %cst_16 {dimension_numbers = #tpu.dot_dimension_numbers<[1], [0], [0], [1], [0, 0, 1, 1], [], []>} : vector<4x120xf32>, vector<120x136xf32>, vector<4x136xf32> -> vector<4x136xf32>
    %30 = arith.mulf %29, %29 : vector<4x136xf32>
    %31 = vector.shape_cast %30 : vector<4x136xf32> to vector<1x4x136xf32>
    %cst_17 = arith.constant dense<0.000000e+00> : vector<1xf32>
    %32 = vector.multi_reduction <add>, %31, %cst_17 [1, 2] : vector<1x4x136xf32> to vector<1xf32>
    %33 = vector.shape_cast %32 : vector<1xf32> to vector<1x1x1xf32>
    %34 = vector.extract %33[0, 0, 0] : f32 from vector<1x1x1xf32>
    %c0_18 = arith.constant 0 : index
    %c0_19 = arith.constant 0 : index
    %35 = vector.load %arg4[%c0_18, %c0_19] : memref<4x120xf32, #tpu.memory_space<vmem>>, vector<4x120xf32>
    %cst_20 = arith.constant dense<0.000000e+00> : vector<4x136xf32>
    %36 = tpu.matmul %35, %3, %cst_20 {dimension_numbers = #tpu.dot_dimension_numbers<[1], [0], [0], [1], [0, 0, 1, 1], [], []>} : vector<4x120xf32>, vector<120x136xf32>, vector<4x136xf32> -> vector<4x136xf32>
    %c0_21 = arith.constant 0 : index
    %c0_22 = arith.constant 0 : index
    %37 = vector.load %arg4[%c0_21, %c0_22] : memref<4x120xf32, #tpu.memory_space<vmem>>, vector<4x120xf32>
    %cst_23 = arith.constant dense<0.000000e+00> : vector<4x136xf32>
    %38 = tpu.matmul %37, %4, %cst_23 {dimension_numbers = #tpu.dot_dimension_numbers<[1], [0], [0], [1], [0, 0, 1, 1], [], []>} : vector<4x120xf32>, vector<120x136xf32>, vector<4x136xf32> -> vector<4x136xf32>
    %39 = math.absf %36 : vector<4x136xf32>
    %40 = math.absf %38 : vector<4x136xf32>
    %41 = arith.subf %39, %40 : vector<4x136xf32>
    %c0_24 = arith.constant 0 : index
    %c0_25 = arith.constant 0 : index
    %42 = vector.load %arg7[%c0_24, %c0_25] : memref<1x136xf32, #tpu.memory_space<vmem>>, vector<1x136xf32>
    %43 = vector.broadcast %42 : vector<1x136xf32> to vector<4x136xf32>
    %44 = arith.mulf %43, %41 : vector<4x136xf32>
    %45 = arith.mulf %44, %41 : vector<4x136xf32>
    %46 = vector.shape_cast %45 : vector<4x136xf32> to vector<1x4x136xf32>
    %cst_26 = arith.constant dense<0.000000e+00> : vector<1xf32>
    %47 = vector.multi_reduction <add>, %46, %cst_26 [1, 2] : vector<1x4x136xf32> to vector<1xf32>
    %48 = vector.shape_cast %47 : vector<1xf32> to vector<1x1x1xf32>
    %49 = vector.extract %48[0, 0, 0] : f32 from vector<1x1x1xf32>
    %50 = tpu.iota {dimensions = array<i32: 2>} : vector<1x8x128xi32>
    %c0_i32_27 = arith.constant 0 : i32
    %51 = vector.broadcast %c0_i32_27 : i32 to vector<1x8x128xi32>
    %52 = arith.cmpi eq, %50, %51 : vector<1x8x128xi32>
    %cst_28 = arith.constant 0.000000e+00 : f32
    %53 = vector.broadcast %14 : f32 to vector<1x8x128xf32>
    %54 = vector.broadcast %cst_28 : f32 to vector<1x8x128xf32>
    %55 = arith.select %52, %53, %54 : vector<1x8x128xi1>, vector<1x8x128xf32>
    %c1_i32 = arith.constant 1 : i32
    %56 = vector.broadcast %c1_i32 : i32 to vector<1x8x128xi32>
    %57 = arith.cmpi eq, %50, %56 : vector<1x8x128xi32>
    %cst_29 = arith.constant 0.000000e+00 : f32
    %58 = vector.broadcast %24 : f32 to vector<1x8x128xf32>
    %59 = vector.broadcast %cst_29 : f32 to vector<1x8x128xf32>
    %60 = arith.select %57, %58, %59 : vector<1x8x128xi1>, vector<1x8x128xf32>
    %61 = arith.addf %55, %60 : vector<1x8x128xf32>
    %c2_i32 = arith.constant 2 : i32
    %62 = vector.broadcast %c2_i32 : i32 to vector<1x8x128xi32>
    %63 = arith.cmpi eq, %50, %62 : vector<1x8x128xi32>
    %cst_30 = arith.constant 0.000000e+00 : f32
    %64 = vector.broadcast %34 : f32 to vector<1x8x128xf32>
    %65 = vector.broadcast %cst_30 : f32 to vector<1x8x128xf32>
    %66 = arith.select %63, %64, %65 : vector<1x8x128xi1>, vector<1x8x128xf32>
    %67 = arith.addf %61, %66 : vector<1x8x128xf32>
    %c3_i32 = arith.constant 3 : i32
    %68 = vector.broadcast %c3_i32 : i32 to vector<1x8x128xi32>
    %69 = arith.cmpi eq, %50, %68 : vector<1x8x128xi32>
    %cst_31 = arith.constant 0.000000e+00 : f32
    %70 = vector.broadcast %49 : f32 to vector<1x8x128xf32>
    %71 = vector.broadcast %cst_31 : f32 to vector<1x8x128xf32>
    %72 = arith.select %69, %70, %71 : vector<1x8x128xi1>, vector<1x8x128xf32>
    %73 = arith.addf %67, %72 : vector<1x8x128xf32>
    %c0_32 = arith.constant 0 : index
    %c0_33 = arith.constant 0 : index
    %c0_34 = arith.constant 0 : index
    %74 = vector.load %arg10[%c0_32, %c0_33, %c0_34] : memref<1x8x128xf32, #tpu.memory_space<vmem>>, vector<1x8x128xf32>
    %75 = arith.addf %74, %73 : vector<1x8x128xf32>
    %c0_35 = arith.constant 0 : index
    %c0_36 = arith.constant 0 : index
    %c0_37 = arith.constant 0 : index
    %76 = vector.load %arg10[%c0_35, %c0_36, %c0_37] : memref<1x8x128xf32, #tpu.memory_space<vmem>>, vector<1x8x128xf32>
    tpu.vector_store %arg10[%c0_35, %c0_36, %c0_37], %75 {strides = array<i32>} : memref<1x8x128xf32, #tpu.memory_space<vmem>>, vector<1x8x128xf32>,
    return
  }
  func.func @transform_0(%arg0: i32, %arg1: i32) -> (i32, i32) {
    %c0_i32 = arith.constant 0 : i32
    %c0_i32_0 = arith.constant 0 : i32
    %c0_i32_1 = arith.constant 0 : i32
    return %c0_i32, %c0_i32_0 : i32, i32
  }
  func.func @transform_1(%arg0: i32, %arg1: i32) -> (i32, i32) {
    %c0_i32 = arith.constant 0 : i32
    %c0_i32_0 = arith.constant 0 : i32
    %c0_i32_1 = arith.constant 0 : i32
    return %c0_i32, %c0_i32_0 : i32, i32
  }
  func.func @transform_2(%arg0: i32, %arg1: i32) -> (i32, i32) {
    %c0_i32 = arith.constant 0 : i32
    %c0_i32_0 = arith.constant 0 : i32
    %c0_i32_1 = arith.constant 0 : i32
    return %c0_i32, %c0_i32_0 : i32, i32
  }
  func.func @transform_3(%arg0: i32, %arg1: i32) -> (i32, i32) {
    %c0_i32 = arith.constant 0 : i32
    %c0_i32_0 = arith.constant 0 : i32
    %c0_i32_1 = arith.constant 0 : i32
    return %c0_i32, %c0_i32_0 : i32, i32
  }
  func.func @transform_4(%arg0: i32, %arg1: i32) -> (i32, i32) {
    %c0_i32 = arith.constant 0 : i32
    %c0_i32_0 = arith.constant 0 : i32
    %c0_i32_1 = arith.constant 0 : i32
    return %c0_i32, %c0_i32_0 : i32, i32
  }
  func.func @transform_5(%arg0: i32, %arg1: i32) -> (i32, i32) {
    %c0_i32 = arith.constant 0 : i32
    %c0_i32_0 = arith.constant 0 : i32
    %c0_i32_1 = arith.constant 0 : i32
    return %c0_i32, %c0_i32_0 : i32, i32
  }
  func.func @transform_6(%arg0: i32, %arg1: i32) -> (i32, i32) {
    %c1_i32 = arith.constant 1 : i32
    %0 = arith.muli %arg0, %c1_i32 : i32
    %1 = arith.addi %0, %arg1 : i32
    %c0_i32 = arith.constant 0 : i32
    %c0_i32_0 = arith.constant 0 : i32
    return %1, %c0_i32 : i32, i32
  }
  func.func @transform_7(%arg0: i32, %arg1: i32) -> (i32, i32) {
    %c1_i32 = arith.constant 1 : i32
    %0 = arith.muli %arg0, %c1_i32 : i32
    %1 = arith.addi %0, %arg1 : i32
    %c0_i32 = arith.constant 0 : i32
    %c0_i32_0 = arith.constant 0 : i32
    return %1, %c0_i32 : i32, i32
  }
  func.func @transform_8(%arg0: i32, %arg1: i32) -> (i32, i32, i32) {
    %c0_i32 = arith.constant 0 : i32
    %c0_i32_0 = arith.constant 0 : i32
    %c0_i32_1 = arith.constant 0 : i32
    return %arg0, %c0_i32, %c0_i32_0 : i32, i32, i32
  }
}

</mosaic_0001>

<llo_original>
// kernel: lip_cossim_pallas.1
$region0: #{lip_cossim_pallas.1}
  #allocation0 [shape = 'u32[]', space=smem, size = 0x4, offset = 0x4, fixed_abs, tag = 'smem constant byte address 0x4 - core index']
  #allocation1 [shape = 'u32[144,128]{1,0:T(1,128)}', space=vmem, size = 0x12000, scoped, tag = 'internal scratch']
  %s0 = inlined_call_operand.vmem [shape: f32[136,136], index: 0, kind: input, shape index: {}]
  %s1 = inlined_call_operand.vmem [shape: f32[4,120], index: 1, kind: input, shape index: {}]
  %s2 = inlined_call_operand.vmem [shape: f32[4,120], index: 2, kind: input, shape index: {}]
  %s3 = inlined_call_operand.vmem [shape: f32[1,120], index: 3, kind: input, shape index: {}]
  %s4 = inlined_call_operand.vmem [shape: f32[1,119], index: 4, kind: input, shape index: {}]
  %s5 = inlined_call_operand.vmem [shape: f32[1,136], index: 5, kind: input, shape index: {}]
  %s6 = inlined_call_operand.vmem [shape: f32[120,136], index: 6, kind: input, shape index: {}]
  %s7 = inlined_call_operand.vmem [shape: f32[120,136], index: 7, kind: input, shape index: {}]
  %s8 = inlined_call_operand.vmem [shape: f32[1,8,128], index: 8, kind: output, shape index: {}]
  %s9 = sld [smem:[#allocation0]]
  $region46: #{lip_cossim_pallas.1} parent=0
    _
  %s11 = ssub.s32 1, %s9
  %s12 = scalar_select 0, %s11, %s9
  // Predicated region
  $region2: #{lip_cossim_pallas.1} parent=0 // pred_check
    _
  $region3: #{lip_cossim_pallas.1} parent=0 // pred_check_branch
    %14 = sbr.rel (0) target = $region5
  $region4: #{lip_cossim_pallas.1} parent=0 // pred_region
    _
  $region5: #{lip_cossim_pallas.1} parent=0 // pred_fallthru
    _
  // Predicated region
  $region6: #{lip_cossim_pallas.1} parent=0 // pred_check
    _
  $region7: #{lip_cossim_pallas.1} parent=0 // pred_check_branch
    %16 = sbr.rel (0) target = $region9
  $region8: #{lip_cossim_pallas.1} parent=0 // pred_region
    _
  $region9: #{lip_cossim_pallas.1} parent=0 // pred_fallthru
    _
  // Predicated region
  $region10: #{lip_cossim_pallas.1} parent=0 // pred_check
    _
  $region11: #{lip_cossim_pallas.1} parent=0 // pred_check_branch
    %18 = sbr.rel (0) target = $region13
  $region12: #{lip_cossim_pallas.1} parent=0 // pred_region
    _
  $region13: #{lip_cossim_pallas.1} parent=0 // pred_fallthru
    _
  // Predicated region
  $region14: #{lip_cossim_pallas.1} parent=0 // pred_check
    _
  $region15: #{lip_cossim_pallas.1} parent=0 // pred_check_branch
    %20 = sbr.rel (0) target = $region17
  $region16: #{lip_cossim_pallas.1} parent=0 // pred_region
    _
  $region17: #{lip_cossim_pallas.1} parent=0 // pred_fallthru
    _
  // Predicated region
  $region18: #{lip_cossim_pallas.1} parent=0 // pred_check
    _
  $region19: #{lip_cossim_pallas.1} parent=0 // pred_check_branch
    %22 = sbr.rel (0) target = $region21
  $region20: #{lip_cossim_pallas.1} parent=0 // pred_region
    _
  $region21: #{lip_cossim_pallas.1} parent=0 // pred_fallthru
    _
  // Predicated region
  $region22: #{lip_cossim_pallas.1} parent=0 // pred_check
    _
  $region23: #{lip_cossim_pallas.1} parent=0 // pred_check_branch
    %24 = sbr.rel (0) target = $region25
  $region24: #{lip_cossim_pallas.1} parent=0 // pred_region
    _
  $region25: #{lip_cossim_pallas.1} parent=0 // pred_fallthru
    _
  // Predicated region
  $region26: #{lip_cossim_pallas.1} parent=0 // pred_check
    _
  $region27: #{lip_cossim_pallas.1} parent=0 // pred_check_branch
    %26 = sbr.rel (0) target = $region29
  $region28: #{lip_cossim_pallas.1} parent=0 // pred_region
    %s27 = sadd.s32 0, 0
    %s28 = smul.u32 15, %s27
    %p29 = scmp.lt.s32.totalorder %s28, 14
    %s30 = scalar_select %p29, %s28, 14
    %s31 = smul.addr %s30, 2
    %s32 = smul.addr %s31, 8
    %s33 = scalar_lea.vmem %s6, %s32
    %s34 = sadd.s32 0, 0
    %s35 = smul.u32 15, %s34
  $region29: #{lip_cossim_pallas.1} parent=0 // pred_fallthru
    _
  // Predicated region
  $region30: #{lip_cossim_pallas.1} parent=0 // pred_check
    _
  $region31: #{lip_cossim_pallas.1} parent=0 // pred_check_branch
    %37 = sbr.rel (0) target = $region33
  $region32: #{lip_cossim_pallas.1} parent=0 // pred_region
    %s38 = sadd.s32 0, 0
    %s39 = smul.u32 15, %s38
    %p40 = scmp.lt.s32.totalorder %s39, 14
    %s41 = scalar_select %p40, %s39, 14
    %s42 = smul.addr %s41, 2
    %s43 = smul.addr %s42, 8
    %s44 = scalar_lea.vmem %s7, %s43
    %s45 = sadd.s32 0, 0
    %s46 = smul.u32 15, %s45
  $region33: #{lip_cossim_pallas.1} parent=0 // pred_fallthru
    _
  %s47 = sadd.s32 0, 0
  %s48 = smul.u32 15, %s47
  %p49 = scmp.lt.s32.totalorder %s48, 14
  %s50 = scalar_select %p49, %s48, 14
  %s51 = smul.addr %s50, 2
  %s52 = smul.addr %s51, 8
  %s53 = scalar_lea.vmem %s6, %s52
  %s54 = sadd.s32 0, 0
  %s55 = smul.u32 15, %s54
  %p56 = scmp.lt.s32.totalorder %s55, 14
  %s57 = scalar_select %p56, %s55, 14
  %s58 = smul.addr %s57, 2
  %s59 = smul.addr %s58, 8
  %s60 = scalar_lea.vmem %s7, %s59
  %s61 = sadd.s32 0, 0
  %s62 = smul.u32 15, %s61
  %p63 = scmp.lt.s32.totalorder %s62, 14
  %s64 = scalar_select %p63, %s62, 14
  %s65 = smul.addr %s64, 2
  %s66 = smul.addr %s65, 8
  %s67 = scalar_lea.vmem %s6, %s66
  %s68 = sadd.s32 0, 0
  %s69 = smul.u32 15, %s68
  %s70 = sadd.s32 0, 0
  %s71 = smul.u32 15, %s70
  %p72 = scmp.lt.s32.totalorder %s71, 14
  %s73 = scalar_select %p72, %s71, 14
  %s74 = smul.addr %s73, 2
  %s75 = smul.addr %s74, 8
  %s76 = scalar_lea.vmem %s7, %s75
  %s77 = sadd.s32 0, 0
  %s78 = smul.u32 15, %s77
  %p79 = scmp.eq.s32.totalorder 0, 0
  // Predicated region
  $region34: #{lip_cossim_pallas.1} parent=0 // pred_check
    %p80 = pneg %p79
  $region35: #{lip_cossim_pallas.1} parent=0 // pred_check_branch
    %82 = sbr.rel (%p80) target = $region37
  $region36: #{lip_cossim_pallas.1} parent=0 // pred_region
    %83 = vst [vmem:[%s8] sm:$0xff] 0.0
  $region37: #{lip_cossim_pallas.1} parent=0 // pred_fallthru
    _
  %v84 = vld [vmem:[%s67] sm:$0xff]
  %v85 = vld [vmem:[%s67 + $0x8] sm:$0xff]
  %v86 = vld [vmem:[%s67 + $0x10] sm:$0xff]
  %v87 = vld [vmem:[%s67 + $0x18] sm:$0xff]
  %v88 = vld [vmem:[%s67 + $0x20] sm:$0xff]
  %v89 = vld [vmem:[%s67 + $0x28] sm:$0xff]
  %v90 = vld [vmem:[%s67 + $0x30] sm:$0xff]
  %v91 = vld [vmem:[%s67 + $0x38] sm:$0xff]
  %v92 = vld [vmem:[%s67 + $0x40] sm:$0xff]
  %v93 = vld [vmem:[%s67 + $0x48] sm:$0xff]
  %v94 = vld [vmem:[%s67 + $0x50] sm:$0xff]
  %v95 = vld [vmem:[%s67 + $0x58] sm:$0xff]
  %v96 = vld [vmem:[%s67 + $0x60] sm:$0xff]
  %v97 = vld [vmem:[%s67 + $0x68] sm:$0xff]
  %v98 = vld [vmem:[%s67 + $0x70] sm:$0xff]
  %v99 = vld [vmem:[%s67 + $0x78] sm:$0xff]
  %v100 = vld [vmem:[%s67 + $0x80] sm:$0xff]
  %v101 = vld [vmem:[%s67 + $0x88] sm:$0xff]
  %v102 = vld [vmem:[%s67 + $0x90] sm:$0xff]
  %v103 = vld [vmem:[%s67 + $0x98] sm:$0xff]
  %v104 = vld [vmem:[%s67 + $0xa0] sm:$0xff]
  %v105 = vld [vmem:[%s67 + $0xa8] sm:$0xff]
  %v106 = vld [vmem:[%s67 + $0xb0] sm:$0xff]
  %v107 = vld [vmem:[%s67 + $0xb8] sm:$0xff]
  %v108 = vld [vmem:[%s67 + $0xc0] sm:$0xff]
  %v109 = vld [vmem:[%s67 + $0xc8] sm:$0xff]
  %v110 = vld [vmem:[%s67 + $0xd0] sm:$0xff]
  %v111 = vld [vmem:[%s67 + $0xd8] sm:$0xff]
  %v112 = vld [vmem:[%s67 + $0xe0] sm:$0xff]
  %v113 = vld [vmem:[%s67 + $0xe8] sm:$0xff]
  %v114 = vld [vmem:[%s76] sm:$0xff]
  %v115 = vld [vmem:[%s76 + $0x8] sm:$0xff]
  %v116 = vld [vmem:[%s76 + $0x10] sm:$0xff]
  %v117 = vld [vmem:[%s76 + $0x18] sm:$0xff]
  %v118 = vld [vmem:[%s76 + $0x20] sm:$0xff]
  %v119 = vld [vmem:[%s76 + $0x28] sm:$0xff]
  %v120 = vld [vmem:[%s76 + $0x30] sm:$0xff]
  %v121 = vld [vmem:[%s76 + $0x38] sm:$0xff]
  %v122 = vld [vmem:[%s76 + $0x40] sm:$0xff]
  %v123 = vld [vmem:[%s76 + $0x48] sm:$0xff]
  %v124 = vld [vmem:[%s76 + $0x50] sm:$0xff]
  %v125 = vld [vmem:[%s76 + $0x58] sm:$0xff]
  %v126 = vld [vmem:[%s76 + $0x60] sm:$0xff]
  %v127 = vld [vmem:[%s76 + $0x68] sm:$0xff]
  %v128 = vld [vmem:[%s76 + $0x70] sm:$0xff]
  %v129 = vld [vmem:[%s76 + $0x78] sm:$0xff]
  %v130 = vld [vmem:[%s76 + $0x80] sm:$0xff]
  %v131 = vld [vmem:[%s76 + $0x88] sm:$0xff]
  %v132 = vld [vmem:[%s76 + $0x90] sm:$0xff]
  %v133 = vld [vmem:[%s76 + $0x98] sm:$0xff]
  %v134 = vld [vmem:[%s76 + $0xa0] sm:$0xff]
  %v135 = vld [vmem:[%s76 + $0xa8] sm:$0xff]
  %v136 = vld [vmem:[%s76 + $0xb0] sm:$0xff]
  %v137 = vld [vmem:[%s76 + $0xb8] sm:$0xff]
  %v138 = vld [vmem:[%s76 + $0xc0] sm:$0xff]
  %v139 = vld [vmem:[%s76 + $0xc8] sm:$0xff]
  %v140 = vld [vmem:[%s76 + $0xd0] sm:$0xff]
  %v141 = vld [vmem:[%s76 + $0xd8] sm:$0xff]
  %v142 = vld [vmem:[%s76 + $0xe0] sm:$0xff]
  %v143 = vld [vmem:[%s76 + $0xe8] sm:$0xff]
  %v144 = vsub.f32 %v84, %v114
  %v145 = vsub.f32 %v85, %v115
  %v146 = vsub.f32 %v86, %v116
  %v147 = vsub.f32 %v87, %v117
  %v148 = vsub.f32 %v88, %v118
  %v149 = vsub.f32 %v89, %v119
  %v150 = vsub.f32 %v90, %v120
  %v151 = vsub.f32 %v91, %v121
  %v152 = vsub.f32 %v92, %v122
  %v153 = vsub.f32 %v93, %v123
  %v154 = vsub.f32 %v94, %v124
  %v155 = vsub.f32 %v95, %v125
  %v156 = vsub.f32 %v96, %v126
  %v157 = vsub.f32 %v97, %v127
  %v158 = vsub.f32 %v98, %v128
  %v159 = vsub.f32 %v99, %v129
  %v160 = vsub.f32 %v100, %v130
  %v161 = vsub.f32 %v101, %v131
  %v162 = vsub.f32 %v102, %v132
  %v163 = vsub.f32 %v103, %v133
  %v164 = vsub.f32 %v104, %v134
  %v165 = vsub.f32 %v105, %v135
  %v166 = vsub.f32 %v106, %v136
  %v167 = vsub.f32 %v107, %v137
  %v168 = vsub.f32 %v108, %v138
  %v169 = vsub.f32 %v109, %v139
  %v170 = vsub.f32 %v110, %v140
  %v171 = vsub.f32 %v111, %v141
  %v172 = vsub.f32 %v112, %v142
  %v173 = vsub.f32 %v113, %v143
  %v174 = vld [vmem:[%s0] sm:$0xff]
  %v175 = vld [vmem:[%s0 + $0x8] sm:$0xff]
  %v176 = vld [vmem:[%s0 + $0x10] sm:$0xff]
  %v177 = vld [vmem:[%s0 + $0x18] sm:$0xff]
  %v178 = vld [vmem:[%s0 + $0x20] sm:$0xff]
  %v179 = vld [vmem:[%s0 + $0x28] sm:$0xff]
  %v180 = vld [vmem:[%s0 + $0x30] sm:$0xff]
  %v181 = vld [vmem:[%s0 + $0x38] sm:$0xff]
  %v182 = vld [vmem:[%s0 + $0x40] sm:$0xff]
  %v183 = vld [vmem:[%s0 + $0x48] sm:$0xff]
  %v184 = vld [vmem:[%s0 + $0x50] sm:$0xff]
  %v185 = vld [vmem:[%s0 + $0x58] sm:$0xff]
  %v186 = vld [vmem:[%s0 + $0x60] sm:$0xff]
  %v187 = vld [vmem:[%s0 + $0x68] sm:$0xff]
  %v188 = vld [vmem:[%s0 + $0x70] sm:$0xff]
  %v189 = vld [vmem:[%s0 + $0x78] sm:$0xff]
  %v190 = vld [vmem:[%s0 + $0x80] sm:$0xff]
  %v191 = vld [vmem:[%s0 + $0x88] sm:$0xff]
  %v192 = vld [vmem:[%s0 + $0x90] sm:$0xff]
  %v193 = vld [vmem:[%s0 + $0x98] sm:$0xff]
  %v194 = vld [vmem:[%s0 + $0xa0] sm:$0xff]
  %v195 = vld [vmem:[%s0 + $0xa8] sm:$0xff]
  %v196 = vld [vmem:[%s0 + $0xb0] sm:$0xff]
  %v197 = vld [vmem:[%s0 + $0xb8] sm:$0xff]
  %v198 = vld [vmem:[%s0 + $0xc0] sm:$0xff]
  %v199 = vld [vmem:[%s0 + $0xc8] sm:$0xff]
  %v200 = vld [vmem:[%s0 + $0xd0] sm:$0xff]
  %v201 = vld [vmem:[%s0 + $0xd8] sm:$0xff]
  %v202 = vld [vmem:[%s0 + $0xe0] sm:$0xff]
  %v203 = vld [vmem:[%s0 + $0xe8] sm:$0xff]
  %v204 = vld [vmem:[%s0 + $0xf0] sm:$0xff]
  %v205 = vld [vmem:[%s0 + $0xf8] sm:$0xff]
  %v206 = vld [vmem:[%s0 + $0x100] sm:$0xff]
  %v207 = vld [vmem:[%s0 + $0x108] sm:$0xff]
  %vm208 = vcmask 64512
  %v210 = vsel %vm208, %v145, 0
  %v213 = vsel %vm208, %v147, 0
  %v216 = vsel %vm208, %v149, 0
  %v219 = vsel %vm208, %v151, 0
  %v222 = vsel %vm208, %v153, 0
  %v225 = vsel %vm208, %v155, 0
  %v228 = vsel %vm208, %v157, 0
  %v231 = vsel %vm208, %v159, 0
  %v234 = vsel %vm208, %v161, 0
  %v237 = vsel %vm208, %v163, 0
  %v240 = vsel %vm208, %v165, 0
  %v243 = vsel %vm208, %v167, 0
  %v246 = vsel %vm208, %v169, 0
  %v249 = vsel %vm208, %v171, 0
  %v252 = vsel %vm208, %v173, 0
  %254 = vmatprep.subr.mxu0 %v175
  %255 = vmatpush1.msra.mxu0 %v174
  %256 = vmatprep.subr.mxu0 %v177
  %257 = vmatpush1.msra.mxu0 %v176
  %258 = vmatprep.subr.mxu0 %v179
  %259 = vmatpush1.msra.mxu0 %v178
  %260 = vmatprep.subr.mxu0 %v181
  %261 = vmatpush1.msra.mxu0 %v180
  %262 = vmatprep.subr.mxu0 %v183
  %263 = vmatpush1.msra.mxu0 %v182
  %264 = vmatprep.subr.mxu0 %v185
  %265 = vmatpush1.msra.mxu0 %v184
  %266 = vmatprep.subr.mxu0 %v187
  %267 = vmatpush1.msra.mxu0 %v186
  %268 = vmatprep.subr.mxu0 %v189
  %269 = vmatpush1.msra.mxu0 %v188
  %270 = vmatprep.subr.mxu0 %v191
  %271 = vmatpush1.msra.mxu0 %v190
  %272 = vmatprep.subr.mxu0 %v193
  %273 = vmatpush1.msra.mxu0 %v192
  %274 = vmatprep.subr.mxu0 %v195
  %275 = vmatpush1.msra.mxu0 %v194
  %276 = vmatprep.subr.mxu0 %v197
  %277 = vmatpush1.msra.mxu0 %v196
  %278 = vmatprep.subr.mxu0 %v199
  %279 = vmatpush1.msra.mxu0 %v198
  %280 = vmatprep.subr.mxu0 %v201
  %281 = vmatpush1.msra.mxu0 %v200
  %282 = vmatprep.subr.mxu0 %v203
  %283 = vmatpush1.msra.mxu0 %v202
  %284 = vmatprep.subr.mxu0 %v205
  %285 = vmatpush1.msra.mxu0 %v204
  %286 = vmatprep.subr.mxu0 %v207
  %287 = vmatpush1.msra.mxu0 %v206
  %288 = vmatprep.subr.mxu0 0.0
  %289 = vmatpush1.msra.mxu0 0.0
  %290 = vmatprep.subr.mxu0 0.0
  %291 = vmatpush1.msra.mxu0 0.0
  %292 = vmatprep.subr.mxu0 0.0
  %293 = vmatpush1.msra.mxu0 0.0
  %294 = vmatprep.subr.mxu0 0.0
  %295 = vmatpush1.msra.mxu0 0.0
  %296 = vmatprep.subr.mxu0 0.0
  %297 = vmatpush1.msra.mxu0 0.0
  %298 = vmatprep.subr.mxu0 0.0
  %299 = vmatpush1.msra.mxu0 0.0
  %300 = vmatprep.subr.mxu0 0.0
  %301 = vmatpush1.msra.mxu0 0.0
  %302 = vmatprep.subr.mxu0 0.0
  %303 = vmatpush1.msra.mxu0 0.0
  %304 = vmatprep.subr.mxu0 0.0
  %305 = vmatpush1.msra.mxu0 0.0
  %306 = vmatprep.subr.mxu0 0.0
  %307 = vmatpush1.msra.mxu0 0.0
  %308 = vmatprep.subr.mxu0 0.0
  %309 = vmatpush1.msra.mxu0 0.0
  %310 = vmatprep.subr.mxu0 0.0
  %311 = vmatpush1.msra.mxu0 0.0
  %312 = vmatprep.subr.mxu0 0.0
  %313 = vmatpush1.msra.mxu0 0.0
  %314 = vmatprep.subr.mxu0 0.0
  %315 = vmatpush1.msra.mxu0 0.0
  %316 = vmatprep.subr.mxu0 0.0
  %317 = vmatpush1.msra.mxu0 0.0
  %318 = vmatprep.mubr.f32.mxu0 %v210
  %319 = vmatmul.mubr.f32.gmra.mrb[0].mxu0 %v144
  %v320 = vpop.f32.mrb[0].mxu0
  %v321 = vadd.f32 0.0, %v320
  %v322 = vpop.f32.mrb[0].mxu0
  %v323 = vadd.f32 0.0, %v322
  %324 = vmatprep.mubr.f32.mxu0 %v213
  %325 = vmatmul.mubr.f32.gmra.mrb[0].mxu0 %v146
  %v326 = vpop.f32.mrb[0].mxu0
  %v327 = vadd.f32 0.0, %v326
  %v328 = vpop.f32.mrb[0].mxu0
  %v329 = vadd.f32 0.0, %v328
  %330 = vmatprep.mubr.f32.mxu0 %v216
  %331 = vmatmul.mubr.f32.gmra.mrb[0].mxu0 %v148
  %v332 = vpop.f32.mrb[0].mxu0
  %v333 = vadd.f32 0.0, %v332
  %v334 = vpop.f32.mrb[0].mxu0
  %v335 = vadd.f32 0.0, %v334
  %336 = vmatprep.mubr.f32.mxu0 %v219
  %337 = vmatmul.mubr.f32.gmra.mrb[0].mxu0 %v150
  %v338 = vpop.f32.mrb[0].mxu0
  %v339 = vadd.f32 0.0, %v338
  %v340 = vpop.f32.mrb[0].mxu0
  %v341 = vadd.f32 0.0, %v340
  %342 = vmatprep.mubr.f32.mxu0 %v222
  %343 = vmatmul.mubr.f32.gmra.mrb[0].mxu0 %v152
  %v344 = vpop.f32.mrb[0].mxu0
  %v345 = vadd.f32 0.0, %v344
  %v346 = vpop.f32.mrb[0].mxu0
  %v347 = vadd.f32 0.0, %v346
  %348 = vmatprep.mubr.f32.mxu0 %v225
  %349 = vmatmul.mubr.f32.gmra.mrb[0].mxu0 %v154
  %v350 = vpop.f32.mrb[0].mxu0
  %v351 = vadd.f32 0.0, %v350
  %v352 = vpop.f32.mrb[0].mxu0
  %v353 = vadd.f32 0.0, %v352
  %354 = vmatprep.mubr.f32.mxu0 %v228
  %355 = vmatmul.mubr.f32.gmra.mrb[0].mxu0 %v156
  %v356 = vpop.f32.mrb[0].mxu0
  %v357 = vadd.f32 0.0, %v356
  %v358 = vpop.f32.mrb[0].mxu0
  %v359 = vadd.f32 0.0, %v358
  %360 = vmatprep.mubr.f32.mxu0 %v231
  %361 = vmatmul.mubr.f32.gmra.mrb[0].mxu0 %v158
  %v362 = vpop.f32.mrb[0].mxu0
  %v363 = vadd.f32 0.0, %v362
  %v364 = vpop.f32.mrb[0].mxu0
  %v365 = vadd.f32 0.0, %v364
  %366 = vmatprep.mubr.f32.mxu0 %v234
  %367 = vmatmul.mubr.f32.gmra.mrb[0].mxu0 %v160
  %v368 = vpop.f32.mrb[0].mxu0
  %v369 = vadd.f32 0.0, %v368
  %v370 = vpop.f32.mrb[0].mxu0
  %v371 = vadd.f32 0.0, %v370
  %372 = vmatprep.mubr.f32.mxu0 %v237
  %373 = vmatmul.mubr.f32.gmra.mrb[0].mxu0 %v162
  %v374 = vpop.f32.mrb[0].mxu0
  %v375 = vadd.f32 0.0, %v374
  %v376 = vpop.f32.mrb[0].mxu0
  %v377 = vadd.f32 0.0, %v376
  %378 = vmatprep.mubr.f32.mxu0 %v240
  %379 = vmatmul.mubr.f32.gmra.mrb[0].mxu0 %v164
  %v380 = vpop.f32.mrb[0].mxu0
  %v381 = vadd.f32 0.0, %v380
  %v382 = vpop.f32.mrb[0].mxu0
  %v383 = vadd.f32 0.0, %v382
  %384 = vmatprep.mubr.f32.mxu0 %v243
  %385 = vmatmul.mubr.f32.gmra.mrb[0].mxu0 %v166
  %v386 = vpop.f32.mrb[0].mxu0
  %v387 = vadd.f32 0.0, %v386
  %v388 = vpop.f32.mrb[0].mxu0
  %v389 = vadd.f32 0.0, %v388
  %390 = vmatprep.mubr.f32.mxu0 %v246
  %391 = vmatmul.mubr.f32.gmra.mrb[0].mxu0 %v168
  %v392 = vpop.f32.mrb[0].mxu0
  %v393 = vadd.f32 0.0, %v392
  %v394 = vpop.f32.mrb[0].mxu0
  %v395 = vadd.f32 0.0, %v394
  %396 = vmatprep.mubr.f32.mxu0 %v249
  %397 = vmatmul.mubr.f32.gmra.mrb[0].mxu0 %v170
  %v398 = vpop.f32.mrb[0].mxu0
  %v399 = vadd.f32 0.0, %v398
  %v400 = vpop.f32.mrb[0].mxu0
  %v401 = vadd.f32 0.0, %v400
  %402 = vmatprep.mubr.f32.mxu0 %v252
  %403 = vmatmul.mubr.f32.gmra.mrb[0].mxu0 %v172
  %v404 = vpop.f32.mrb[0].mxu0
  %v405 = vadd.f32 0.0, %v404
  %v406 = vpop.f32.mrb[0].mxu0
  %v407 = vadd.f32 0.0, %v406
  %408 = vdwg.mxu0
  %v409 = vld [vmem:[%s3] sm:$0x1]
  %v410 = vand.u32 2147483647, %v321
  %v411 = vand.u32 2147483647, %v323
  %v412 = vand.u32 2147483647, %v327
  %v413 = vand.u32 2147483647, %v329
  %v414 = vand.u32 2147483647, %v333
  %v415 = vand.u32 2147483647, %v335
  %v416 = vand.u32 2147483647, %v339
  %v417 = vand.u32 2147483647, %v341
  %v418 = vand.u32 2147483647, %v345
  %v419 = vand.u32 2147483647, %v347
  %v420 = vand.u32 2147483647, %v351
  %v421 = vand.u32 2147483647, %v353
  %v422 = vand.u32 2147483647, %v357
  %v423 = vand.u32 2147483647, %v359
  %v424 = vand.u32 2147483647, %v363
  %v425 = vand.u32 2147483647, %v365
  %v426 = vand.u32 2147483647, %v369
  %v427 = vand.u32 2147483647, %v371
  %v428 = vand.u32 2147483647, %v375
  %v429 = vand.u32 2147483647, %v377
  %v430 = vand.u32 2147483647, %v381
  %v431 = vand.u32 2147483647, %v383
  %v432 = vand.u32 2147483647, %v387
  %v433 = vand.u32 2147483647, %v389
  %v434 = vand.u32 2147483647, %v393
  %v435 = vand.u32 2147483647, %v395
  %v436 = vand.u32 2147483647, %v399
  %v437 = vand.u32 2147483647, %v401
  %v438 = vand.u32 2147483647, %v405
  %v439 = vand.u32 2147483647, %v407
  %vm440 = vcmask 982016
  %v442 = vsel %vm440, %v409, 0
  %444 = vmatprep.subr.mxu0 %v411
  %445 = vmatpush1.msra.mxu0 %v410
  %446 = vmatprep.subr.mxu0 %v413
  %447 = vmatpush1.msra.mxu0 %v412
  %448 = vmatprep.subr.mxu0 %v415
  %449 = vmatpush1.msra.mxu0 %v414
  %450 = vmatprep.subr.mxu0 %v417
  %451 = vmatpush1.msra.mxu0 %v416
  %452 = vmatprep.subr.mxu0 %v419
  %453 = vmatpush1.msra.mxu0 %v418
  %454 = vmatprep.subr.mxu0 %v421
  %455 = vmatpush1.msra.mxu0 %v420
  %456 = vmatprep.subr.mxu0 %v423
  %457 = vmatpush1.msra.mxu0 %v422
  %458 = vmatprep.subr.mxu0 %v425
  %459 = vmatpush1.msra.mxu0 %v424
  %460 = vmatprep.subr.mxu0 %v427
  %461 = vmatpush1.msra.mxu0 %v426
  %462 = vmatprep.subr.mxu0 %v429
  %463 = vmatpush1.msra.mxu0 %v428
  %464 = vmatprep.subr.mxu0 %v431
  %465 = vmatpush1.msra.mxu0 %v430
  %466 = vmatprep.subr.mxu0 %v433
  %467 = vmatpush1.msra.mxu0 %v432
  %468 = vmatprep.subr.mxu0 %v435
  %469 = vmatpush1.msra.mxu0 %v434
  %470 = vmatprep.subr.mxu0 %v437
  %471 = vmatpush1.msra.mxu0 %v436
  %472 = vmatprep.subr.mxu0 %v439
  %473 = vmatpush1.msra.mxu0 %v438
  %474 = vmatprep.subr.mxu0 0.0
  %475 = vmatpush1.msra.mxu0 0.0
  %476 = vmatprep.subr.mxu0 0.0
  %477 = vmatpush1.msra.mxu0 0.0
  %478 = vmatprep.subr.mxu0 0.0
  %479 = vmatpush1.msra.mxu0 0.0
  %480 = vmatprep.subr.mxu0 0.0
  %481 = vmatpush1.msra.mxu0 0.0
  %482 = vmatprep.subr.mxu0 0.0
  %483 = vmatpush1.msra.mxu0 0.0
  %484 = vmatprep.subr.mxu0 0.0
  %485 = vmatpush1.msra.mxu0 0.0
  %486 = vmatprep.subr.mxu0 0.0
  %487 = vmatpush1.msra.mxu0 0.0
  %488 = vmatprep.subr.mxu0 0.0
  %489 = vmatpush1.msra.mxu0 0.0
  %490 = vmatprep.subr.mxu0 0.0
  %491 = vmatpush1.msra.mxu0 0.0
  %492 = vmatprep.subr.mxu0 0.0
  %493 = vmatpush1.msra.mxu0 0.0
  %494 = vmatprep.subr.mxu0 0.0
  %495 = vmatpush1.msra.mxu0 0.0
  %496 = vmatprep.subr.mxu0 0.0
  %497 = vmatpush1.msra.mxu0 0.0
  %498 = vmatprep.subr.mxu0 0.0
  %499 = vmatpush1.msra.mxu0 0.0
  %500 = vmatprep.subr.mxu0 0.0
  %501 = vmatpush1.msra.mxu0 0.0
  %502 = vmatprep.subr.mxu0 0.0
  %503 = vmatpush1.msra.mxu0 0.0
  %504 = vmatprep.subr.mxu0 0.0
  %505 = vmatpush1.msra.mxu0 0.0
  %506 = vmatprep.subr.mxu0 0.0
  %507 = vmatpush1.msra.mxu0 0.0
  %508 = vmatprep.mubr.f32.mxu0 0.0
  %509 = vmatmul.mubr.f32.gmra.mrb[0].mxu0 %v442
  %v510 = vpop.f32.mrb[0].mxu0
  %v511 = vadd.f32 0.0, %v510
  %v512 = vpop.f32.mrb[0].mxu0
  %v513 = vadd.f32 0.0, %v512
  %514 = vdwg.mxu0
  %vm515 = vcmask 1040384
  %v516 = vsel %vm515, %v511, 0.0
  %vm517 = vcmask 57344
  %v518 = vsel %vm517, %v513, 0.0
  %v519 = vadd.f32 %v516, %v518
  %520 = vadd.xlane.f32.xlu0 %v519
  %v521 = vpop.xlane.xlu0 %520
  %v522 = vrot.slane %v521, 4
  %v523 = vadd.f32 %v521, %v522
  %v524 = vrot.slane %v523, 2
  %v525 = vadd.f32 %v523, %v524
  %v526 = vrot.slane %v525, 1
  %v527 = vadd.f32 %v525, %v526
  %s528 = vtos %v527
  %v559 = vrot.slane %v321, 7
  %v560 = vrot.slane %v323, 7
  %v561 = vrot.slane %v327, 7
  %v562 = vsel %vm515, %v559, %v561
  %v563 = vrot.slane %v329, 7
  %v564 = vsel %vm515, %v560, %v563
  %v565 = vrot.slane %v333, 7
  %v566 = vsel %vm515, %v561, %v565
  %v567 = vrot.slane %v335, 7
  %v568 = vsel %vm515, %v563, %v567
  %v569 = vrot.slane %v339, 7
  %v570 = vsel %vm515, %v565, %v569
  %v571 = vrot.slane %v341, 7
  %v572 = vsel %vm515, %v567, %v571
  %v573 = vrot.slane %v345, 7
  %v574 = vsel %vm515, %v569, %v573
  %v575 = vrot.slane %v347, 7
  %v576 = vsel %vm515, %v571, %v575
  %v577 = vrot.slane %v351, 7
  %v578 = vsel %vm515, %v573, %v577
  %v579 = vrot.slane %v353, 7
  %v580 = vsel %vm515, %v575, %v579
  %v581 = vrot.slane %v357, 7
  %v582 = vsel %vm515, %v577, %v581
  %v583 = vrot.slane %v359, 7
  %v584 = vsel %vm515, %v579, %v583
  %v585 = vrot.slane %v363, 7
  %v586 = vsel %vm515, %v581, %v585
  %v587 = vrot.slane %v365, 7
  %v588 = vsel %vm515, %v583, %v587
  %v589 = vrot.slane %v369, 7
  %v590 = vsel %vm515, %v585, %v589
  %v591 = vrot.slane %v371, 7
  %v592 = vsel %vm515, %v587, %v591
  %v593 = vrot.slane %v375, 7
  %v594 = vsel %vm515, %v589, %v593
  %v595 = vrot.slane %v377, 7
  %v596 = vsel %vm515, %v591, %v595
  %v597 = vrot.slane %v381, 7
  %v598 = vsel %vm515, %v593, %v597
  %v599 = vrot.slane %v383, 7
  %v600 = vsel %vm515, %v595, %v599
  %v601 = vrot.slane %v387, 7
  %v602 = vsel %vm515, %v597, %v601
  %v603 = vrot.slane %v389, 7
  %v604 = vsel %vm515, %v599, %v603
  %v605 = vrot.slane %v393, 7
  %v606 = vsel %vm515, %v601, %v605
  %v607 = vrot.slane %v395, 7
  %v608 = vsel %vm515, %v603, %v607
  %v609 = vrot.slane %v399, 7
  %v610 = vsel %vm515, %v605, %v609
  %v611 = vrot.slane %v401, 7
  %v612 = vsel %vm515, %v607, %v611
  %v613 = vrot.slane %v405, 7
  %v614 = vsel %vm515, %v609, %v613
  %v615 = vrot.slane %v407, 7
  %v616 = vsel %vm515, %v611, %v615
  %v647 = vsub.f32 %v321, %v559
  %v648 = vsub.f32 %v323, %v560
  %v649 = vsub.f32 %v327, %v562
  %v650 = vsub.f32 %v329, %v564
  %v651 = vsub.f32 %v333, %v566
  %v652 = vsub.f32 %v335, %v568
  %v653 = vsub.f32 %v339, %v570
  %v654 = vsub.f32 %v341, %v572
  %v655 = vsub.f32 %v345, %v574
  %v656 = vsub.f32 %v347, %v576
  %v657 = vsub.f32 %v351, %v578
  %v658 = vsub.f32 %v353, %v580
  %v659 = vsub.f32 %v357, %v582
  %v660 = vsub.f32 %v359, %v584
  %v661 = vsub.f32 %v363, %v586
  %v662 = vsub.f32 %v365, %v588
  %v663 = vsub.f32 %v369, %v590
  %v664 = vsub.f32 %v371, %v592
  %v665 = vsub.f32 %v375, %v594
  %v666 = vsub.f32 %v377, %v596
  %v667 = vsub.f32 %v381, %v598
  %v668 = vsub.f32 %v383, %v600
  %v669 = vsub.f32 %v387, %v602
  %v670 = vsub.f32 %v389, %v604
  %v671 = vsub.f32 %v393, %v606
  %v672 = vsub.f32 %v395, %v608
  %v673 = vsub.f32 %v399, %v610
  %v674 = vsub.f32 %v401, %v612
  %v675 = vsub.f32 %v405, %v614
  %v676 = vsub.f32 %v407, %v616
  %v677 = vld [vmem:[%s4] sm:$0x1]
  %v678 = vand.u32 2147483647, %v647
  %v679 = vand.u32 2147483647, %v648
  %v680 = vand.u32 2147483647, %v649
  %v681 = vand.u32 2147483647, %v650
  %v682 = vand.u32 2147483647, %v651
  %v683 = vand.u32 2147483647, %v652
  %v684 = vand.u32 2147483647, %v653
  %v685 = vand.u32 2147483647, %v654
  %v686 = vand.u32 2147483647, %v655
  %v687 = vand.u32 2147483647, %v656
  %v688 = vand.u32 2147483647, %v657
  %v689 = vand.u32 2147483647, %v658
  %v690 = vand.u32 2147483647, %v659
  %v691 = vand.u32 2147483647, %v660
  %v692 = vand.u32 2147483647, %v661
  %v693 = vand.u32 2147483647, %v662
  %v694 = vand.u32 2147483647, %v663
  %v695 = vand.u32 2147483647, %v664
  %v696 = vand.u32 2147483647, %v665
  %v697 = vand.u32 2147483647, %v666
  %v698 = vand.u32 2147483647, %v667
  %v699 = vand.u32 2147483647, %v668
  %v700 = vand.u32 2147483647, %v669
  %v701 = vand.u32 2147483647, %v670
  %v702 = vand.u32 2147483647, %v671
  %v703 = vand.u32 2147483647, %v672
  %v704 = vand.u32 2147483647, %v673
  %v705 = vand.u32 2147483647, %v674
  %v706 = vand.u32 2147483647, %v675
  %v707 = vand.u32 2147483647, %v676
  %vm738 = vcmask 1046528
  %v739 = vrot.slane %v678, 1
  %v740 = vrot.slane %v680, 1
  %v741 = vsel %vm738, %v739, %v740
  %v742 = vrot.slane %v679, 1
  %v743 = vrot.slane %v681, 1
  %v744 = vsel %vm738, %v742, %v743
  %v745 = vrot.slane %v682, 1
  %v746 = vsel %vm738, %v740, %v745
  %v747 = vrot.slane %v683, 1
  %v748 = vsel %vm738, %v743, %v747
  %v749 = vrot.slane %v684, 1
  %v750 = vsel %vm738, %v745, %v749
  %v751 = vrot.slane %v685, 1
  %v752 = vsel %vm738, %v747, %v751
  %v753 = vrot.slane %v686, 1
  %v754 = vsel %vm738, %v749, %v753
  %v755 = vrot.slane %v687, 1
  %v756 = vsel %vm738, %v751, %v755
  %v757 = vrot.slane %v688, 1
  %v758 = vsel %vm738, %v753, %v757
  %v759 = vrot.slane %v689, 1
  %v760 = vsel %vm738, %v755, %v759
  %v761 = vrot.slane %v690, 1
  %v762 = vsel %vm738, %v757, %v761
  %v763 = vrot.slane %v691, 1
  %v764 = vsel %vm738, %v759, %v763
  %v765 = vrot.slane %v692, 1
  %v766 = vsel %vm738, %v761, %v765
  %v767 = vrot.slane %v693, 1
  %v768 = vsel %vm738, %v763, %v767
  %v769 = vrot.slane %v694, 1
  %v770 = vsel %vm738, %v765, %v769
  %v771 = vrot.slane %v695, 1
  %v772 = vsel %vm738, %v767, %v771
  %v773 = vrot.slane %v696, 1
  %v774 = vsel %vm738, %v769, %v773
  %v775 = vrot.slane %v697, 1
  %v776 = vsel %vm738, %v771, %v775
  %v777 = vrot.slane %v698, 1
  %v778 = vsel %vm738, %v773, %v777
  %v779 = vrot.slane %v699, 1
  %v780 = vsel %vm738, %v775, %v779
  %v781 = vrot.slane %v700, 1
  %v782 = vsel %vm738, %v777, %v781
  %v783 = vrot.slane %v701, 1
  %v784 = vsel %vm738, %v779, %v783
  %v785 = vrot.slane %v702, 1
  %v786 = vsel %vm738, %v781, %v785
  %v787 = vrot.slane %v703, 1
  %v788 = vsel %vm738, %v783, %v787
  %v789 = vrot.slane %v704, 1
  %v790 = vsel %vm738, %v785, %v789
  %v791 = vrot.slane %v705, 1
  %v792 = vsel %vm738, %v787, %v791
  %v793 = vrot.slane %v706, 1
  %v794 = vsel %vm738, %v789, %v793
  %v795 = vrot.slane %v707, 1
  %v796 = vsel %vm738, %v791, %v795
  %vm825 = vcmask 973824
  %v827 = vsel %vm825, %v677, 0
  %v829 = vsel %vm738, %v793, 0
  %v831 = vsel %vm738, %v795, 0
  %833 = vmatprep.subr.mxu0 %v744
  %834 = vmatpush1.msra.mxu0 %v741
  %835 = vmatprep.subr.mxu0 %v748
  %836 = vmatpush1.msra.mxu0 %v746
  %837 = vmatprep.subr.mxu0 %v752
  %838 = vmatpush1.msra.mxu0 %v750
  %839 = vmatprep.subr.mxu0 %v756
  %840 = vmatpush1.msra.mxu0 %v754
  %841 = vmatprep.subr.mxu0 %v760
  %842 = vmatpush1.msra.mxu0 %v758
  %843 = vmatprep.subr.mxu0 %v764
  %844 = vmatpush1.msra.mxu0 %v762
  %845 = vmatprep.subr.mxu0 %v768
  %846 = vmatpush1.msra.mxu0 %v766
  %847 = vmatprep.subr.mxu0 %v772
  %848 = vmatpush1.msra.mxu0 %v770
  %849 = vmatprep.subr.mxu0 %v776
  %850 = vmatpush1.msra.mxu0 %v774
  %851 = vmatprep.subr.mxu0 %v780
  %852 = vmatpush1.msra.mxu0 %v778
  %853 = vmatprep.subr.mxu0 %v784
  %854 = vmatpush1.msra.mxu0 %v782
  %855 = vmatprep.subr.mxu0 %v788
  %856 = vmatpush1.msra.mxu0 %v786
  %857 = vmatprep.subr.mxu0 %v792
  %858 = vmatpush1.msra.mxu0 %v790
  %859 = vmatprep.subr.mxu0 %v796
  %860 = vmatpush1.msra.mxu0 %v794
  %861 = vmatprep.subr.mxu0 %v831
  %862 = vmatpush1.msra.mxu0 %v829
  %863 = vmatprep.subr.mxu0 0.0
  %864 = vmatpush1.msra.mxu0 0.0
  %865 = vmatprep.subr.mxu0 0.0
  %866 = vmatpush1.msra.mxu0 0.0
  %867 = vmatprep.subr.mxu0 0.0
  %868 = vmatpush1.msra.mxu0 0.0
  %869 = vmatprep.subr.mxu0 0.0
  %870 = vmatpush1.msra.mxu0 0.0
  %871 = vmatprep.subr.mxu0 0.0
  %872 = vmatpush1.msra.mxu0 0.0
  %873 = vmatprep.subr.mxu0 0.0
  %874 = vmatpush1.msra.mxu0 0.0
  %875 = vmatprep.subr.mxu0 0.0
  %876 = vmatpush1.msra.mxu0 0.0
  %877 = vmatprep.subr.mxu0 0.0
  %878 = vmatpush1.msra.mxu0 0.0
  %879 = vmatprep.subr.mxu0 0.0
  %880 = vmatpush1.msra.mxu0 0.0
  %881 = vmatprep.subr.mxu0 0.0
  %882 = vmatpush1.msra.mxu0 0.0
  %883 = vmatprep.subr.mxu0 0.0
  %884 = vmatpush1.msra.mxu0 0.0
  %885 = vmatprep.subr.mxu0 0.0
  %886 = vmatpush1.msra.mxu0 0.0
  %887 = vmatprep.subr.mxu0 0.0
  %888 = vmatpush1.msra.mxu0 0.0
  %889 = vmatprep.subr.mxu0 0.0
  %890 = vmatpush1.msra.mxu0 0.0
  %891 = vmatprep.subr.mxu0 0.0
  %892 = vmatpush1.msra.mxu0 0.0
  %893 = vmatprep.subr.mxu0 0.0
  %894 = vmatpush1.msra.mxu0 0.0
  %895 = vmatprep.subr.mxu0 0.0
  %896 = vmatpush1.msra.mxu0 0.0
  %897 = vmatprep.mubr.f32.mxu0 0.0
  %898 = vmatmul.mubr.f32.gmra.mrb[0].mxu0 %v827
  %v899 = vpop.f32.mrb[0].mxu0
  %v900 = vadd.f32 0.0, %v899
  %v901 = vpop.f32.mrb[0].mxu0
  %v902 = vadd.f32 0.0, %v901
  %903 = vdwg.mxu0
  %v904 = vsel %vm515, %v900, 0.0
  %v905 = vsel %vm517, %v902, 0.0
  %v906 = vadd.f32 %v904, %v905
  %907 = vadd.xlane.f32.xlu0 %v906
  %v908 = vpop.xlane.xlu0 %907
  %v909 = vrot.slane %v908, 4
  %v910 = vadd.f32 %v908, %v909
  %v911 = vrot.slane %v910, 2
  %v912 = vadd.f32 %v910, %v911
  %v913 = vrot.slane %v912, 1
  %v914 = vadd.f32 %v912, %v913
  %s915 = vtos %v914
  %v916 = vld [vmem:[%s1] sm:$0xf]
  %v917 = vand.u32 2147483647, %v84
  %v918 = vand.u32 2147483647, %v85
  %v919 = vand.u32 2147483647, %v86
  %v920 = vand.u32 2147483647, %v87
  %v921 = vand.u32 2147483647, %v88
  %v922 = vand.u32 2147483647, %v89
  %v923 = vand.u32 2147483647, %v90
  %v924 = vand.u32 2147483647, %v91
  %v925 = vand.u32 2147483647, %v92
  %v926 = vand.u32 2147483647, %v93
  %v927 = vand.u32 2147483647, %v94
  %v928 = vand.u32 2147483647, %v95
  %v929 = vand.u32 2147483647, %v96
  %v930 = vand.u32 2147483647, %v97
  %v931 = vand.u32 2147483647, %v98
  %v932 = vand.u32 2147483647, %v99
  %v933 = vand.u32 2147483647, %v100
  %v934 = vand.u32 2147483647, %v101
  %v935 = vand.u32 2147483647, %v102
  %v936 = vand.u32 2147483647, %v103
  %v937 = vand.u32 2147483647, %v104
  %v938 = vand.u32 2147483647, %v105
  %v939 = vand.u32 2147483647, %v106
  %v940 = vand.u32 2147483647, %v107
  %v941 = vand.u32 2147483647, %v108
  %v942 = vand.u32 2147483647, %v109
  %v943 = vand.u32 2147483647, %v110
  %v944 = vand.u32 2147483647, %v111
  %v945 = vand.u32 2147483647, %v112
  %v946 = vand.u32 2147483647, %v113
  %v947 = vand.u32 2147483647, %v114
  %v948 = vand.u32 2147483647, %v115
  %v949 = vand.u32 2147483647, %v116
  %v950 = vand.u32 2147483647, %v117
  %v951 = vand.u32 2147483647, %v118
  %v952 = vand.u32 2147483647, %v119
  %v953 = vand.u32 2147483647, %v120
  %v954 = vand.u32 2147483647, %v121
  %v955 = vand.u32 2147483647, %v122
  %v956 = vand.u32 2147483647, %v123
  %v957 = vand.u32 2147483647, %v124
  %v958 = vand.u32 2147483647, %v125
  %v959 = vand.u32 2147483647, %v126
  %v960 = vand.u32 2147483647, %v127
  %v961 = vand.u32 2147483647, %v128
  %v962 = vand.u32 2147483647, %v129
  %v963 = vand.u32 2147483647, %v130
  %v964 = vand.u32 2147483647, %v131
  %v965 = vand.u32 2147483647, %v132
  %v966 = vand.u32 2147483647, %v133
  %v967 = vand.u32 2147483647, %v134
  %v968 = vand.u32 2147483647, %v135
  %v969 = vand.u32 2147483647, %v136
  %v970 = vand.u32 2147483647, %v137
  %v971 = vand.u32 2147483647, %v138
  %v972 = vand.u32 2147483647, %v139
  %v973 = vand.u32 2147483647, %v140
  %v974 = vand.u32 2147483647, %v141
  %v975 = vand.u32 2147483647, %v142
  %v976 = vand.u32 2147483647, %v143
  %v977 = vsub.f32 %v917, %v947
  %v978 = vsub.f32 %v918, %v948
  %v979 = vsub.f32 %v919, %v949
  %v980 = vsub.f32 %v920, %v950
  %v981 = vsub.f32 %v921, %v951
  %v982 = vsub.f32 %v922, %v952
  %v983 = vsub.f32 %v923, %v953
  %v984 = vsub.f32 %v924, %v954
  %v985 = vsub.f32 %v925, %v955
  %v986 = vsub.f32 %v926, %v956
  %v987 = vsub.f32 %v927, %v957
  %v988 = vsub.f32 %v928, %v958
  %v989 = vsub.f32 %v929, %v959
  %v990 = vsub.f32 %v930, %v960
  %v991 = vsub.f32 %v931, %v961
  %v992 = vsub.f32 %v932, %v962
  %v993 = vsub.f32 %v933, %v963
  %v994 = vsub.f32 %v934, %v964
  %v995 = vsub.f32 %v935, %v965
  %v996 = vsub.f32 %v936, %v966
  %v997 = vsub.f32 %v937, %v967
  %v998 = vsub.f32 %v938, %v968
  %v999 = vsub.f32 %v939, %v969
  %v1000 = vsub.f32 %v940, %v970
  %v1001 = vsub.f32 %v941, %v971
  %v1002 = vsub.f32 %v942, %v972
  %v1003 = vsub.f32 %v943, %v973
  %v1004 = vsub.f32 %v944, %v974
  %v1005 = vsub.f32 %v945, %v975
  %v1006 = vsub.f32 %v946, %v976
  %v1008 = vsel %vm440, %v916, 0
  %1010 = vmatprep.subr.mxu0 %v978
  %1011 = vmatpush1.msra.mxu0 %v977
  %1012 = vmatprep.subr.mxu0 %v980
  %1013 = vmatpush1.msra.mxu0 %v979
  %1014 = vmatprep.subr.mxu0 %v982
  %1015 = vmatpush1.msra.mxu0 %v981
  %1016 = vmatprep.subr.mxu0 %v984
  %1017 = vmatpush1.msra.mxu0 %v983
  %1018 = vmatprep.subr.mxu0 %v986
  %1019 = vmatpush1.msra.mxu0 %v985
  %1020 = vmatprep.subr.mxu0 %v988
  %1021 = vmatpush1.msra.mxu0 %v987
  %1022 = vmatprep.subr.mxu0 %v990
  %1023 = vmatpush1.msra.mxu0 %v989
  %1024 = vmatprep.subr.mxu0 %v992
  %1025 = vmatpush1.msra.mxu0 %v991
  %1026 = vmatprep.subr.mxu0 %v994
  %1027 = vmatpush1.msra.mxu0 %v993
  %1028 = vmatprep.subr.mxu0 %v996
  %1029 = vmatpush1.msra.mxu0 %v995
  %1030 = vmatprep.subr.mxu0 %v998
  %1031 = vmatpush1.msra.mxu0 %v997
  %1032 = vmatprep.subr.mxu0 %v1000
  %1033 = vmatpush1.msra.mxu0 %v999
  %1034 = vmatprep.subr.mxu0 %v1002
  %1035 = vmatpush1.msra.mxu0 %v1001
  %1036 = vmatprep.subr.mxu0 %v1004
  %1037 = vmatpush1.msra.mxu0 %v1003
  %1038 = vmatprep.subr.mxu0 %v1006
  %1039 = vmatpush1.msra.mxu0 %v1005
  %1040 = vmatprep.subr.mxu0 0.0
  %1041 = vmatpush1.msra.mxu0 0.0
  %1042 = vmatprep.subr.mxu0 0.0
  %1043 = vmatpush1.msra.mxu0 0.0
  %1044 = vmatprep.subr.mxu0 0.0
  %1045 = vmatpush1.msra.mxu0 0.0
  %1046 = vmatprep.subr.mxu0 0.0
  %1047 = vmatpush1.msra.mxu0 0.0
  %1048 = vmatprep.subr.mxu0 0.0
  %1049 = vmatpush1.msra.mxu0 0.0
  %1050 = vmatprep.subr.mxu0 0.0
  %1051 = vmatpush1.msra.mxu0 0.0
  %1052 = vmatprep.subr.mxu0 0.0
  %1053 = vmatpush1.msra.mxu0 0.0
  %1054 = vmatprep.subr.mxu0 0.0
  %1055 = vmatpush1.msra.mxu0 0.0
  %1056 = vmatprep.subr.mxu0 0.0
  %1057 = vmatpush1.msra.mxu0 0.0
  %1058 = vmatprep.subr.mxu0 0.0
  %1059 = vmatpush1.msra.mxu0 0.0
  %1060 = vmatprep.subr.mxu0 0.0
  %1061 = vmatpush1.msra.mxu0 0.0
  %1062 = vmatprep.subr.mxu0 0.0
  %1063 = vmatpush1.msra.mxu0 0.0
  %1064 = vmatprep.subr.mxu0 0.0
  %1065 = vmatpush1.msra.mxu0 0.0
  %1066 = vmatprep.subr.mxu0 0.0
  %1067 = vmatpush1.msra.mxu0 0.0
  %1068 = vmatprep.subr.mxu0 0.0
  %1069 = vmatpush1.msra.mxu0 0.0
  %1070 = vmatprep.subr.mxu0 0.0
  %1071 = vmatpush1.msra.mxu0 0.0
  %1072 = vmatprep.subr.mxu0 0.0
  %1073 = vmatpush1.msra.mxu0 0.0
  %1074 = vmatprep.mubr.f32.mxu0 0.0
  %1075 = vmatmul.mubr.f32.gmra.mrb[0].mxu0 %v1008
  %v1076 = vpop.f32.mrb[0].mxu0
  %v1077 = vadd.f32 0.0, %v1076
  %v1078 = vpop.f32.mrb[0].mxu0
  %v1079 = vadd.f32 0.0, %v1078
  %1080 = vdwg.mxu0
  %v1081 = vmul.f32 %v1077, %v1077
  %v1082 = vmul.f32 %v1079, %v1079
  %vm1083 = vcmask 1043456
  %v1084 = vsel %vm1083, %v1081, 0.0
  %vm1085 = vcmask 60416
  %v1086 = vsel %vm1085, %v1082, 0.0
  %v1087 = vadd.f32 %v1084, %v1086
  %1088 = vadd.xlane.f32.xlu0 %v1087
  %v1089 = vpop.xlane.xlu0 %1088
  %v1090 = vrot.slane %v1089, 4
  %v1091 = vadd.f32 %v1089, %v1090
  %v1092 = vrot.slane %v1091, 2
  %v1093 = vadd.f32 %v1091, %v1092
  %v1094 = vrot.slane %v1093, 1
  %v1095 = vadd.f32 %v1093, %v1094
  %s1096 = vtos %v1095
  %v1097 = vld [vmem:[%s2] sm:$0xf]
  %v1099 = vsel %vm440, %v1097, 0
  %1101 = vmatprep.subr.mxu0 %v85
  %1102 = vmatpush1.msra.mxu0 %v84
  %1103 = vmatprep.subr.mxu0 %v87
  %1104 = vmatpush1.msra.mxu0 %v86
  %1105 = vmatprep.subr.mxu0 %v89
  %1106 = vmatpush1.msra.mxu0 %v88
  %1107 = vmatprep.subr.mxu0 %v91
  %1108 = vmatpush1.msra.mxu0 %v90
  %1109 = vmatprep.subr.mxu0 %v93
  %1110 = vmatpush1.msra.mxu0 %v92
  %1111 = vmatprep.subr.mxu0 %v95
  %1112 = vmatpush1.msra.mxu0 %v94
  %1113 = vmatprep.subr.mxu0 %v97
  %1114 = vmatpush1.msra.mxu0 %v96
  %1115 = vmatprep.subr.mxu0 %v99
  %1116 = vmatpush1.msra.mxu0 %v98
  %1117 = vmatprep.subr.mxu0 %v101
  %1118 = vmatpush1.msra.mxu0 %v100
  %1119 = vmatprep.subr.mxu0 %v103
  %1120 = vmatpush1.msra.mxu0 %v102
  %1121 = vmatprep.subr.mxu0 %v105
  %1122 = vmatpush1.msra.mxu0 %v104
  %1123 = vmatprep.subr.mxu0 %v107
  %1124 = vmatpush1.msra.mxu0 %v106
  %1125 = vmatprep.subr.mxu0 %v109
  %1126 = vmatpush1.msra.mxu0 %v108
  %1127 = vmatprep.subr.mxu0 %v111
  %1128 = vmatpush1.msra.mxu0 %v110
  %1129 = vmatprep.subr.mxu0 %v113
  %1130 = vmatpush1.msra.mxu0 %v112
  %1131 = vmatprep.subr.mxu0 0.0
  %1132 = vmatpush1.msra.mxu0 0.0
  %1133 = vmatprep.subr.mxu0 0.0
  %1134 = vmatpush1.msra.mxu0 0.0
  %1135 = vmatprep.subr.mxu0 0.0
  %1136 = vmatpush1.msra.mxu0 0.0
  %1137 = vmatprep.subr.mxu0 0.0
  %1138 = vmatpush1.msra.mxu0 0.0
  %1139 = vmatprep.subr.mxu0 0.0
  %1140 = vmatpush1.msra.mxu0 0.0
  %1141 = vmatprep.subr.mxu0 0.0
  %1142 = vmatpush1.msra.mxu0 0.0
  %1143 = vmatprep.subr.mxu0 0.0
  %1144 = vmatpush1.msra.mxu0 0.0
  %1145 = vmatprep.subr.mxu0 0.0
  %1146 = vmatpush1.msra.mxu0 0.0
  %1147 = vmatprep.subr.mxu0 0.0
  %1148 = vmatpush1.msra.mxu0 0.0
  %1149 = vmatprep.subr.mxu0 0.0
  %1150 = vmatpush1.msra.mxu0 0.0
  %1151 = vmatprep.subr.mxu0 0.0
  %1152 = vmatpush1.msra.mxu0 0.0
  %1153 = vmatprep.subr.mxu0 0.0
  %1154 = vmatpush1.msra.mxu0 0.0
  %1155 = vmatprep.subr.mxu0 0.0
  %1156 = vmatpush1.msra.mxu0 0.0
  %1157 = vmatprep.subr.mxu0 0.0
  %1158 = vmatpush1.msra.mxu0 0.0
  %1159 = vmatprep.subr.mxu0 0.0
  %1160 = vmatpush1.msra.mxu0 0.0
  %1161 = vmatprep.subr.mxu0 0.0
  %1162 = vmatpush1.msra.mxu0 0.0
  %1163 = vmatprep.subr.mxu0 0.0
  %1164 = vmatpush1.msra.mxu0 0.0
  %1165 = vmatprep.mubr.f32.mxu0 0.0
  %1166 = vmatmul.mubr.f32.gmra.mrb[0].mxu0 %v1099
  %v1167 = vpop.f32.mrb[0].mxu0
  %v1168 = vadd.f32 0.0, %v1167
  %v1169 = vpop.f32.mrb[0].mxu0
  %v1170 = vadd.f32 0.0, %v1169
  %1171 = vdwg.mxu0
  %1172 = vmatprep.subr.mxu0 %v115
  %1173 = vmatpush1.msra.mxu0 %v114
  %1174 = vmatprep.subr.mxu0 %v117
  %1175 = vmatpush1.msra.mxu0 %v116
  %1176 = vmatprep.subr.mxu0 %v119
  %1177 = vmatpush1.msra.mxu0 %v118
  %1178 = vmatprep.subr.mxu0 %v121
  %1179 = vmatpush1.msra.mxu0 %v120
  %1180 = vmatprep.subr.mxu0 %v123
  %1181 = vmatpush1.msra.mxu0 %v122
  %1182 = vmatprep.subr.mxu0 %v125
  %1183 = vmatpush1.msra.mxu0 %v124
  %1184 = vmatprep.subr.mxu0 %v127
  %1185 = vmatpush1.msra.mxu0 %v126
  %1186 = vmatprep.subr.mxu0 %v129
  %1187 = vmatpush1.msra.mxu0 %v128
  %1188 = vmatprep.subr.mxu0 %v131
  %1189 = vmatpush1.msra.mxu0 %v130
  %1190 = vmatprep.subr.mxu0 %v133
  %1191 = vmatpush1.msra.mxu0 %v132
  %1192 = vmatprep.subr.mxu0 %v135
  %1193 = vmatpush1.msra.mxu0 %v134
  %1194 = vmatprep.subr.mxu0 %v137
  %1195 = vmatpush1.msra.mxu0 %v136
  %1196 = vmatprep.subr.mxu0 %v139
  %1197 = vmatpush1.msra.mxu0 %v138
  %1198 = vmatprep.subr.mxu0 %v141
  %1199 = vmatpush1.msra.mxu0 %v140
  %1200 = vmatprep.subr.mxu0 %v143
  %1201 = vmatpush1.msra.mxu0 %v142
  %1202 = vmatprep.subr.mxu0 0.0
  %1203 = vmatpush1.msra.mxu0 0.0
  %1204 = vmatprep.subr.mxu0 0.0
  %1205 = vmatpush1.msra.mxu0 0.0
  %1206 = vmatprep.subr.mxu0 0.0
  %1207 = vmatpush1.msra.mxu0 0.0
  %1208 = vmatprep.subr.mxu0 0.0
  %1209 = vmatpush1.msra.mxu0 0.0
  %1210 = vmatprep.subr.mxu0 0.0
  %1211 = vmatpush1.msra.mxu0 0.0
  %1212 = vmatprep.subr.mxu0 0.0
  %1213 = vmatpush1.msra.mxu0 0.0
  %1214 = vmatprep.subr.mxu0 0.0
  %1215 = vmatpush1.msra.mxu0 0.0
  %1216 = vmatprep.subr.mxu0 0.0
  %1217 = vmatpush1.msra.mxu0 0.0
  %1218 = vmatprep.subr.mxu0 0.0
  %1219 = vmatpush1.msra.mxu0 0.0
  %1220 = vmatprep.subr.mxu0 0.0
  %1221 = vmatpush1.msra.mxu0 0.0
  %1222 = vmatprep.subr.mxu0 0.0
  %1223 = vmatpush1.msra.mxu0 0.0
  %1224 = vmatprep.subr.mxu0 0.0
  %1225 = vmatpush1.msra.mxu0 0.0
  %1226 = vmatprep.subr.mxu0 0.0
  %1227 = vmatpush1.msra.mxu0 0.0
  %1228 = vmatprep.subr.mxu0 0.0
  %1229 = vmatpush1.msra.mxu0 0.0
  %1230 = vmatprep.subr.mxu0 0.0
  %1231 = vmatpush1.msra.mxu0 0.0
  %1232 = vmatprep.subr.mxu0 0.0
  %1233 = vmatpush1.msra.mxu0 0.0
  %1234 = vmatprep.subr.mxu0 0.0
  %1235 = vmatpush1.msra.mxu0 0.0
  %1236 = vmatprep.mubr.f32.mxu0 0.0
  %1237 = vmatmul.mubr.f32.gmra.mrb[0].mxu0 %v1099
  %v1238 = vpop.f32.mrb[0].mxu0
  %v1239 = vadd.f32 0.0, %v1238
  %v1240 = vpop.f32.mrb[0].mxu0
  %v1241 = vadd.f32 0.0, %v1240
  %1242 = vdwg.mxu0
  %v1243 = vand.u32 2147483647, %v1168
  %v1244 = vand.u32 2147483647, %v1170
  %v1245 = vand.u32 2147483647, %v1239
  %v1246 = vand.u32 2147483647, %v1241
  %v1247 = vsub.f32 %v1243, %v1245
  %v1248 = vsub.f32 %v1244, %v1246
  %v1249 = vld [vmem:[%s5] sm:$0x3]
  %v1251 = vlaneseq
  %v1252 = vshrl.u32 %v1251, 7
  %v1253 = vsub.s32 0, %v1252
  %v1254 = vrot.slane %v1249, %v1253
  %v1255 = vlaneseq
  %v1256 = vshrl.u32 %v1255, 7
  %v1257 = vsub.s32 1, %v1256
  %v1258 = vrot.slane %v1249, %v1257
  %v1261 = vmul.f32 %v1254, %v1247
  %v1262 = vmul.f32 %v1258, %v1248
  %v1263 = vmul.f32 %v1261, %v1247
  %v1264 = vmul.f32 %v1262, %v1248
  %v1265 = vsel %vm1083, %v1263, 0.0
  %v1266 = vsel %vm1085, %v1264, 0.0
  %v1267 = vadd.f32 %v1265, %v1266
  %1268 = vadd.xlane.f32.xlu0 %v1267
  %v1269 = vpop.xlane.xlu0 %1268
  %v1270 = vrot.slane %v1269, 4
  %v1271 = vadd.f32 %v1269, %v1270
  %v1272 = vrot.slane %v1271, 2
  %v1273 = vadd.f32 %v1271, %v1272
  %v1274 = vrot.slane %v1273, 1
  %v1275 = vadd.f32 %v1273, %v1274
  %s1276 = vtos %v1275
  %v1277 = vlaneseq
  %v1278 = vand.u32 %v1277, 127
  %vm1279 = vcmp.eq.s32.totalorder %v1278, 0
  %v1280 = vstv %s528
  %v1281 = vsel %vm1279, %v1280, 0.0
  %vm1282 = vcmp.eq.s32.totalorder %v1278, 1
  %v1283 = vstv %s915
  %v1284 = vsel %vm1282, %v1283, 0.0
  %v1285 = vadd.f32 %v1281, %v1284
  %vm1286 = vcmp.eq.s32.totalorder %v1278, 2
  %v1287 = vstv %s1096
  %v1288 = vsel %vm1286, %v1287, 0.0
  %v1289 = vadd.f32 %v1285, %v1288
  %vm1290 = vcmp.eq.s32.totalorder %v1278, 3
  %v1291 = vstv %s1276
  %v1292 = vsel %vm1290, %v1291, 0.0
  %v1293 = vadd.f32 %v1289, %v1292
  %v1294 = vld [vmem:[%s8] sm:$0xff]
  %v1295 = vadd.f32 %v1294, %v1293
  %1296 = vst [vmem:[%s8] sm:$0xff] %v1295
  // Predicated region
  $region38: #{lip_cossim_pallas.1} parent=0 // pred_check
    _
  $region39: #{lip_cossim_pallas.1} parent=0 // pred_check_branch
    %1298 = sbr.rel (0) target = $region41
  $region40: #{lip_cossim_pallas.1} parent=0 // pred_region
    _
  $region41: #{lip_cossim_pallas.1} parent=0 // pred_fallthru
    _
  // Predicated region
  $region42: #{lip_cossim_pallas.1} parent=0 // pred_check
    _
  $region43: #{lip_cossim_pallas.1} parent=0 // pred_check_branch
    %1300 = sbr.rel (0) target = $region45
  $region44: #{lip_cossim_pallas.1} parent=0 // pred_region
    _
  $region45: #{lip_cossim_pallas.1} parent=0 // pred_fallthru
    _

</llo_original>
